<compile_context>
chip_gen: v6e
topology: v6e:2x2x1
jax: 0.10.0
libtpu: 0.0.40
codegen_flags: <defaults>
</compile_context>

<pallas_src>
import jax
import jax.numpy as jnp
from jax.experimental import pallas as pl
from jax.experimental.pallas import tpu as pltpu

LANES = 128  # lane width of a vreg (last-dim tile)


def _round_up(x: int, m: int) -> int:
    return ((x + m - 1) // m) * m


def _max_tile_rows() -> int:
    # 8192 x 128 f32 = 4 MiB/tile (~16 MiB live with double-buffered in+out):
    # fine under the 32 MiB scoped-VMEM defaults on v6e/v7x.  v5e (16 MiB
    # scoped default) and unknown chips get 2 MiB tiles.
    try:
        kind = jax.devices()[0].device_kind.lower()
    except Exception:
        return 4096
    if "v6" in kind or "v7" in kind:
        return 8192
    return 4096


def linear_kernel(wb_ref, x_ref, o_ref):
    # wb_ref: (2,) f32 in SMEM  ->  [w, b] scalars (broadcast into the VPU op)
    # x_ref : (tile_r, 128) lane-dense slab of the batch in VMEM
    # o_ref : (tile_r, 128) in VMEM (full-width unmasked stores)
    w = wb_ref[0]
    b = wb_ref[1]
    o_ref[...] = (x_ref[...].astype(jnp.float32) * w + b).astype(o_ref.dtype)


def manual_linear_regression(x, weight, bias):
    """x: (B, 1), weight: (1, 1), bias: (1,) -> (B, 1)."""
    B, F = x.shape
    assert F == 1 and weight.shape == (1, 1) and bias.shape == (1,)
    dtype = x.dtype

    # --- repack (B, 1) into a lane-dense (rows, 128) slab -------------------
    rows = -(-B // LANES)                      # ceil(B / 128)
    padded = rows * LANES
    x_flat = x.reshape(B)
    if padded != B:
        # Pad only to the next 128 boundary; allow_input_fusion lets XLA fuse
        # this producer into the pallas_call operand (no extra HBM pass).
        x_flat = jnp.pad(x_flat, (0, padded - B))
    x_slab = x_flat.reshape(rows, LANES)       # free (bitcast) reshape

    # --- row tiling: >=2 grid steps when possible (feeds both v7x TCs) ------
    if rows <= 8:
        tile_r = rows                          # single full-array block
    else:
        tile_r = min(_max_tile_rows(), _round_up(pl.cdiv(rows, 2), 8))
    grid = (pl.cdiv(rows, tile_r),)            # partial last block is masked

    # --- scalars on the 32-bit SMEM path (kept f32 regardless of x dtype) ---
    wb = jnp.concatenate(
        [weight.reshape(-1), bias.reshape(-1)]
    ).astype(jnp.float32)                      # (2,): [w, b]

    out_slab = pl.pallas_call(
        linear_kernel,
        out_shape=jax.ShapeDtypeStruct((rows, LANES), dtype),
        grid_spec=pl.GridSpec(
            grid=grid,
            in_specs=[
                # whole (2,) array lives in SMEM, no tiling / no VMEM DMA
                pl.BlockSpec(memory_space=pltpu.MemorySpace.SMEM),
                # lane-dense, auto-pipelined row tiles
                pl.BlockSpec((tile_r, LANES), lambda i: (i, 0)),
            ],
            out_specs=pl.BlockSpec((tile_r, LANES), lambda i: (i, 0)),
        ),
        compiler_params=pltpu.CompilerParams(
            dimension_semantics=("parallel",),
            allow_input_fusion=[False, True],
        ),
    )(wb, x_slab)

    # --- unpack back to (B, 1); free reshape when B is 128-aligned ----------
    if padded == B:
        return out_slab.reshape(B, 1)
    return out_slab.reshape(padded)[:B].reshape(B, 1)


if __name__ == "__main__":
    key = jax.random.PRNGKey(0)
    kx, kw, kb = jax.random.split(key, 3)

    batch = 8
    x = jax.random.normal(kx, (batch, 1), dtype=jnp.float32)

    # Deterministic parameter init, mimicking nn.Linear's uniform(-bound, bound)
    # with bound = 1/sqrt(in_features) = 1.
    weight = jax.random.uniform(kw, (1, 1), dtype=jnp.float32, minval=-1.0, maxval=1.0)
    bias = jax.random.uniform(kb, (1,), dtype=jnp.float32, minval=-1.0, maxval=1.0)

    out = manual_linear_regression(x, weight, bias)
    out = jax.block_until_ready(out)

    # Reference check in plain JAX (y = x @ W^T + b)
    ref = x @ weight.T + bias
    assert out.shape == (batch, 1)
    assert jnp.allclose(out, ref, atol=1e-6), "mismatch vs reference"

    print("KERNEL_OK")
</pallas_src>

<mosaic_0001>
module attributes {stable_mosaic.version = 11 : i64} {
  func.func @linear_kernel(%arg0: i32, %arg1: memref<2xf32, #tpu.memory_space<smem>>, %arg2: memref<1x128xf32, #tpu.memory_space<vmem>>, %arg3: memref<1x128xf32, #tpu.memory_space<vmem>>) attributes {dimension_semantics = [#tpu.dimension_semantics<parallel>], iteration_bounds = array<i64: 1>, scalar_prefetch = 0 : i64, scratch_operands = 0 : i64, tpu.core_type = #tpu.core_type<tc>, window_params = [{transform_indices = @transform_0, window_bounds = array<i64: 2>}, {transform_indices = @transform_1, window_bounds = array<i64: 1, 128>}, {transform_indices = @transform_2, window_bounds = array<i64: 1, 128>}]} {
    %c0 = arith.constant 0 : index
    %0 = memref.load %arg1[%c0] : memref<2xf32, #tpu.memory_space<smem>>
    %c1 = arith.constant 1 : index
    %1 = memref.load %arg1[%c1] : memref<2xf32, #tpu.memory_space<smem>>
    %c0_0 = arith.constant 0 : index
    %c0_1 = arith.constant 0 : index
    %2 = vector.load %arg2[%c0_0, %c0_1] : memref<1x128xf32, #tpu.memory_space<vmem>>, vector<1x128xf32>
    %3 = vector.broadcast %0 : f32 to vector<1x128xf32>
    %4 = arith.mulf %2, %3 : vector<1x128xf32>
    %5 = vector.broadcast %1 : f32 to vector<1x128xf32>
    %6 = arith.addf %4, %5 : vector<1x128xf32>
    %c0_2 = arith.constant 0 : index
    %c0_3 = arith.constant 0 : index
    %7 = vector.load %arg3[%c0_2, %c0_3] : memref<1x128xf32, #tpu.memory_space<vmem>>, vector<1x128xf32>
    tpu.vector_store %arg3[%c0_2, %c0_3], %6 {strides = array<i32>} : memref<1x128xf32, #tpu.memory_space<vmem>>, vector<1x128xf32>,
    return
  }
  func.func @transform_0(%arg0: i32) -> i32 {
    %c0_i32 = arith.constant 0 : i32
    %c0_i32_0 = arith.constant 0 : i32
    return %c0_i32 : i32
  }
  func.func @transform_1(%arg0: i32) -> (i32, i32) {
    %c0_i32 = arith.constant 0 : i32
    %c0_i32_0 = arith.constant 0 : i32
    return %arg0, %c0_i32 : i32, i32
  }
  func.func @transform_2(%arg0: i32) -> (i32, i32) {
    %c0_i32 = arith.constant 0 : i32
    %c0_i32_0 = arith.constant 0 : i32
    return %arg0, %c0_i32 : i32, i32
  }
}

</mosaic_0001>

<llo_original>
// kernel: tpu_custom_call.1
$region0: #{tpu_custom_call.1}
  #allocation0 [shape = 'u32[]', space=smem, size = 0x4, offset = 0x4, fixed_abs, tag = 'smem constant byte address 0x4 - core index']
  #allocation1 [shape = 'u32[144,128]{1,0:T(1,128)}', space=vmem, size = 0x12000, scoped, tag = 'internal scratch']
  %s0 = inlined_call_operand.hbm [shape: f32[2], index: 0, kind: input, shape index: {}]
  %s1 = inlined_call_operand.vmem [shape: f32[1,128], index: 1, kind: input, shape index: {}]
  %s2 = inlined_call_operand.hbm [shape: f32[1,128], index: 2, kind: output, shape index: {}]
  %s3 = sld [smem:[#allocation0]]
  $region22: #{tpu_custom_call.1} parent=0
    _
  %s5 = ssub.s32 1, %s3
  %s6 = scalar_select 0, %s5, %s3
  $region1: #{tpu_custom_call.1} parent=0
    #allocation2 [shape = 'u8[512]{0}', space=smem, size = 0x200, scoped, tag = 'input window, operand 0, single buffered']
    #allocation3 [shape = 's32[1]{0}', space=sflag, size = 0x4, scoped, tag = 'scoped memory for tpu_custom_call.1']
    #allocation4 [shape = 's32[1]{0}', space=sflag, size = 0x4, scoped, tag = 'scoped memory for tpu_custom_call.1']
    #allocation5 [shape = 'u8[512]{0}', space=vmem, size = 0x400, scoped, tag = 'output window, operand 0, single buffered']
    %7 = vsyncpa [#allocation4], 0
    %8 = vsyncpa [#allocation3], 0
    // Predicated region
    $region2: #{tpu_custom_call.1} parent=1 // pred_check
      _
    $region3: #{tpu_custom_call.1} parent=1 // pred_check_branch
      %10 = sbr.rel (0) target = $region5
    $region4: #{tpu_custom_call.1} parent=1 // pred_region
      %s12 = ssub.s32 16, 16
      %13 = vsyncadd [#allocation4], %s12
      %16 = dma.hbm_to_smem %s0, 16, [#allocation2], [#allocation4]
    $region5: #{tpu_custom_call.1} parent=1 // pred_fallthru
      _
    // Predicated region
    $region6: #{tpu_custom_call.1} parent=1 // pred_check
      _
    $region7: #{tpu_custom_call.1} parent=1 // pred_check_branch
      %18 = sbr.rel (0) target = $region9
    $region8: #{tpu_custom_call.1} parent=1 // pred_region
      _
    $region9: #{tpu_custom_call.1} parent=1 // pred_fallthru
      _
    // Predicated region
    $region10: #{tpu_custom_call.1} parent=1 // pred_check
      _
    $region11: #{tpu_custom_call.1} parent=1 // pred_check_branch
      %20 = sbr.rel (0) target = $region13
    $region12: #{tpu_custom_call.1} parent=1 // pred_region
      %21 = dma.done [#allocation4], 16
    $region13: #{tpu_custom_call.1} parent=1 // pred_fallthru
      _
    %22 = sfence
    %s23 = sld [smem:[#allocation2]]
    %s24 = sld [smem:[#allocation2 + $0x1]]
    %v25 = vld [vmem:[%s1] sm:$0x1]
    %v26 = vstv %s23
    %v27 = vmul.f32 %v25, %v26
    %v28 = vstv %s24
    %v29 = vadd.f32 %v27, %v28
    %30 = vst [vmem:[#allocation5] sm:$0x1] %v29
    // Predicated region
    $region14: #{tpu_custom_call.1} parent=1 // pred_check
      _
    $region15: #{tpu_custom_call.1} parent=1 // pred_check_branch
      %32 = sbr.rel (0) target = $region17
    $region16: #{tpu_custom_call.1} parent=1 // pred_region
      %s34 = ssub.s32 16, 16
      %35 = vsyncadd [#allocation3], %s34
      %s37 = sshll.u32 [#allocation5], 4
      %s38 = int_to_ptr.vmem [resolvable:$true] %s37
      %40 = dma.vmem_to_hbm [thread:$0]  %s38, 16, %s2, [#allocation3]
    $region17: #{tpu_custom_call.1} parent=1 // pred_fallthru
      _
    // Predicated region
    $region18: #{tpu_custom_call.1} parent=1 // pred_check
      _
    $region19: #{tpu_custom_call.1} parent=1 // pred_check_branch
      %42 = sbr.rel (0) target = $region21
    $region20: #{tpu_custom_call.1} parent=1 // pred_region
      %43 = dma.done [#allocation3], 16
    $region21: #{tpu_custom_call.1} parent=1 // pred_fallthru
      _
    %44 = vsyncpa [#allocation3], 1
    %45 = vsyncpa [#allocation4], 1

</llo_original>
